<compile_context>
chip_gen: v6e
topology: v6e:2x2x1
jax: 0.10.0
libtpu: 0.0.40
codegen_flags: <defaults>
</compile_context>

<pallas_src>
import functools

import jax
import jax.numpy as jnp
import numpy as np
from jax import lax
from jax.experimental import pallas as pl
from jax.experimental.pallas import tpu as pltpu


def _round_up(x, m):
    return (x + m - 1) // m * m


def _sepconv_kernel(x_ref, wf_ref, o_ref, patches_ref, *, Wp, kh, kw, cin, lout):
    """im2col + a single MXU matmul.

    x_ref:       (1, cin, Lin)      zero-padded image, spatial flattened (rows of
                                    width Wp) on the 128-lane axis.
    wf_ref:      (cout, kh*kw*cin)  fused depthwise+pointwise weights.
    o_ref:       (1, cout, lout)    lane-dense flat output (rows of width Wp).
    patches_ref: (kh*kw*cin, lout)  VMEM scratch: im2col patch matrix.
    """
    x = x_ref[0]                                     # (cin, Lin), loaded once
    # Build the patch matrix: each kernel tap is a static lane shift of the
    # flat padded image (cheap XLU work), stacked along sublanes.
    for dy in range(kh):
        for dx in range(kw):
            t = dy * kw + dx
            s = dy * Wp + dx
            patches_ref[pl.ds(t * cin, cin), :] = x[:, s:s + lout]
    # One (cout, K) @ (K, lout) MXU matmul replaces the old broadcast FMAs.
    o_ref[0] = jnp.dot(
        wf_ref[...], patches_ref[...],
        preferred_element_type=jnp.float32).astype(o_ref.dtype)


def separable_conv2d(x_nchw, w_dw, w_pw, kernel_size, kernels_per_layer):
    """x_nchw: (N, Cin, H, W); w_dw: (Cin*kpl, 1, kh, kw); w_pw: (Cout, Cin*kpl, 1, 1)."""
    N, Cin, H, W = x_nchw.shape
    kh = kw = kernel_size
    kpl = kernels_per_layer
    Cout = w_pw.shape[0]

    # 'same' padding (odd kernel -> symmetric, matching PyTorch).  NOTE: the
    # flat lane-shift mapping below assumes a square, odd kernel size.
    ph_lo = (kh - 1) // 2
    ph_hi = (kh - 1) - ph_lo
    pw_lo = (kw - 1) // 2
    pw_hi = (kw - 1) - pw_lo
    Hp, Wp = H + kh - 1, W + kw - 1

    L = H * Wp                                # flat output length (Wp-wide rows)
    Lout = _round_up(L, 128)                  # lane-aligned output/acc length
    max_shift = (kh - 1) * Wp + (kw - 1)      # largest tap lane shift
    # Fold the trailing flat zero padding (so every tap window of width Lout
    # stays in bounds) into the bottom spatial pad -> one jnp.pad HLO total.
    extra_rows = -(-(max(0, max_shift + Lout - Hp * Wp)) // Wp)
    Lin = (Hp + extra_rows) * Wp

    x_pad = jnp.pad(x_nchw, ((0, 0), (0, 0),
                             (ph_lo, ph_hi + extra_rows), (pw_lo, pw_hi)))
    x_flat = x_pad.reshape(N, Cin, Lin)       # metadata-only reshape

    # Fuse depthwise + pointwise weights (valid: no bias, no nonlinearity).
    # wf[o, dy, dx, c] = sum_j w_pw[o, c*kpl+j] * w_dw[c*kpl+j, 0, dy, dx]
    dw = w_dw[:, 0, :, :].reshape(Cin, kpl, kh, kw)          # (c, j, dy, dx)
    pw = w_pw[:, :, 0, 0].reshape(Cout, Cin, kpl)            # (o, c, j)
    wf = jnp.einsum("ocj,cjyx->oyxc", pw, dw,
                    precision=lax.Precision.HIGHEST)
    wf = wf.reshape(Cout, kh * kw * Cin).astype(x_nchw.dtype)

    kernel = functools.partial(_sepconv_kernel, Wp=Wp, kh=kh, kw=kw,
                               cin=Cin, lout=Lout)

    out_flat = pl.pallas_call(
        kernel,
        out_shape=jax.ShapeDtypeStruct((N, Cout, Lout), x_nchw.dtype),
        grid_spec=pltpu.PrefetchScalarGridSpec(
            num_scalar_prefetch=0,
            # One image per step: 2 "parallel" steps feed both v7x TCs; on
            # single-TC v5e/v6e the extra step costs only ~0.35 us.
            grid=(N,),
            in_specs=[
                pl.BlockSpec((1, Cin, Lin), lambda n: (n, 0, 0)),
                pl.BlockSpec((Cout, kh * kw * Cin), lambda n: (0, 0)),
            ],
            out_specs=pl.BlockSpec((1, Cout, Lout), lambda n: (n, 0, 0)),
            scratch_shapes=[pltpu.VMEM((kh * kw * Cin, Lout), x_nchw.dtype)],
        ),
        compiler_params=pltpu.CompilerParams(dimension_semantics=("parallel",)),
    )(x_flat, wf)

    # Kernel rows are Wp wide; drop the (Wp-W) scratch columns and the
    # lane-alignment tail.  Output is already NCHW -> no transpose.
    out = out_flat[:, :, :L].reshape(N, Cout, H, Wp)[:, :, :, :W]
    # TODO(synk): for large H/W add a leading "parallel" row-tile grid axis
    # with kh-1 halo rows, sizing tiles against v7x's 64 MiB VMEM
    # (set vmem_limit_bytes explicitly and leave ~25% headroom).
    return out


def _reference(x_nchw, w_dw, w_pw, kernel_size):
    """Pure-JAX reference matching torch.nn.Conv2d semantics (unfused)."""
    Cin = x_nchw.shape[1]
    kh = kw = kernel_size
    ph_lo = (kh - 1) // 2
    ph_hi = (kh - 1) - ph_lo
    pw_lo = (kw - 1) // 2
    pw_hi = (kw - 1) - pw_lo
    dw = lax.conv_general_dilated(
        x_nchw, w_dw, window_strides=(1, 1),
        padding=[(ph_lo, ph_hi), (pw_lo, pw_hi)],
        feature_group_count=Cin,
        dimension_numbers=("NCHW", "OIHW", "NCHW"),
        precision=lax.Precision.HIGHEST)
    pw = lax.conv_general_dilated(
        dw, w_pw, window_strides=(1, 1), padding="VALID",
        dimension_numbers=("NCHW", "OIHW", "NCHW"),
        precision=lax.Precision.HIGHEST)
    return pw


if __name__ == "__main__":
    # Module config: SeparableConv2d(in_channels=4, out_channels=8, kernel_size=3,
    #                                kernels_per_layer=2, bias=False)
    N, Cin, H, W = 2, 4, 16, 16
    kernel_size = 3
    kpl = 2
    Cout = 8

    key = jax.random.PRNGKey(0)
    kx, kdw, kpw = jax.random.split(key, 3)
    x = jax.random.normal(kx, (N, Cin, H, W), dtype=jnp.float32)
    # Deterministic parameter init (shapes match nn.Conv2d weights, bias=False).
    w_dw = jax.random.normal(kdw, (Cin * kpl, 1, kernel_size, kernel_size),
                             dtype=jnp.float32) * 0.1
    w_pw = jax.random.normal(kpw, (Cout, Cin * kpl, 1, 1), dtype=jnp.float32) * 0.1

    out = jax.block_until_ready(separable_conv2d(x, w_dw, w_pw, kernel_size, kpl))

    ref = jax.block_until_ready(_reference(x, w_dw, w_pw, kernel_size))
    # Tolerance relaxed vs. the pure-VPU version: the MXU f32 matmul may use
    # reduced-precision passes and the fused weights change summation order
    # relative to the two-pass HIGHEST-precision reference.
    np.testing.assert_allclose(np.asarray(out), np.asarray(ref),
                               rtol=2e-3, atol=2e-3)

    print("KERNEL_OK")
</pallas_src>

<mosaic_0001>
module attributes {stable_mosaic.version = 11 : i64} {
  func.func @_sepconv_kernel(%arg0: i32, %arg1: memref<1x4x432xf32, #tpu.memory_space<vmem>>, %arg2: memref<8x36xf32, #tpu.memory_space<vmem>>, %arg3: memref<1x8x384xf32, #tpu.memory_space<vmem>>, %arg4: memref<36x384xf32, #tpu.memory_space<vmem>>) attributes {dimension_semantics = [#tpu.dimension_semantics<parallel>], iteration_bounds = array<i64: 2>, scalar_prefetch = 0 : i64, scratch_operands = 1 : i64, tpu.core_type = #tpu.core_type<tc>, window_params = [{transform_indices = @transform_0, window_bounds = array<i64: 1, 4, 432>}, {pipeline_mode = #tpu.pipeline_mode<synchronous>, transform_indices = @transform_1, window_bounds = array<i64: 8, 36>}, {transform_indices = @transform_2, window_bounds = array<i64: 1, 8, 384>}]} {
    %c0 = arith.constant 0 : index
    %c0_0 = arith.constant 0 : index
    %c0_1 = arith.constant 0 : index
    %0 = vector.load %arg1[%c0, %c0_0, %c0_1] : memref<1x4x432xf32, #tpu.memory_space<vmem>>, vector<1x4x432xf32>
    %1 = vector.shape_cast %0 : vector<1x4x432xf32> to vector<4x432xf32>
    %2 = vector.extract_strided_slice %1 {offsets = [0, 0], sizes = [4, 384], strides = [1, 1]} : vector<4x432xf32> to vector<4x384xf32>
    %c0_2 = arith.constant 0 : index
    %c0_3 = arith.constant 0 : index
    %3 = vector.load %arg4[%c0_2, %c0_3] : memref<36x384xf32, #tpu.memory_space<vmem>>, vector<4x384xf32>
    tpu.vector_store %arg4[%c0_2, %c0_3], %2 {strides = array<i32>} : memref<36x384xf32, #tpu.memory_space<vmem>>, vector<4x384xf32>,
    %4 = vector.extract_strided_slice %1 {offsets = [0, 1], sizes = [4, 384], strides = [1, 1]} : vector<4x432xf32> to vector<4x384xf32>
    %c4 = arith.constant 4 : index
    %c0_4 = arith.constant 0 : index
    %5 = vector.load %arg4[%c4, %c0_4] : memref<36x384xf32, #tpu.memory_space<vmem>>, vector<4x384xf32>
    tpu.vector_store %arg4[%c4, %c0_4], %4 {strides = array<i32>} : memref<36x384xf32, #tpu.memory_space<vmem>>, vector<4x384xf32>,
    %6 = vector.extract_strided_slice %1 {offsets = [0, 2], sizes = [4, 384], strides = [1, 1]} : vector<4x432xf32> to vector<4x384xf32>
    %c8 = arith.constant 8 : index
    %c0_5 = arith.constant 0 : index
    %7 = vector.load %arg4[%c8, %c0_5] : memref<36x384xf32, #tpu.memory_space<vmem>>, vector<4x384xf32>
    tpu.vector_store %arg4[%c8, %c0_5], %6 {strides = array<i32>} : memref<36x384xf32, #tpu.memory_space<vmem>>, vector<4x384xf32>,
    %8 = vector.extract_strided_slice %1 {offsets = [0, 18], sizes = [4, 384], strides = [1, 1]} : vector<4x432xf32> to vector<4x384xf32>
    %c12 = arith.constant 12 : index
    %c0_6 = arith.constant 0 : index
    %9 = vector.load %arg4[%c12, %c0_6] : memref<36x384xf32, #tpu.memory_space<vmem>>, vector<4x384xf32>
    tpu.vector_store %arg4[%c12, %c0_6], %8 {strides = array<i32>} : memref<36x384xf32, #tpu.memory_space<vmem>>, vector<4x384xf32>,
    %10 = vector.extract_strided_slice %1 {offsets = [0, 19], sizes = [4, 384], strides = [1, 1]} : vector<4x432xf32> to vector<4x384xf32>
    %c16 = arith.constant 16 : index
    %c0_7 = arith.constant 0 : index
    %11 = vector.load %arg4[%c16, %c0_7] : memref<36x384xf32, #tpu.memory_space<vmem>>, vector<4x384xf32>
    tpu.vector_store %arg4[%c16, %c0_7], %10 {strides = array<i32>} : memref<36x384xf32, #tpu.memory_space<vmem>>, vector<4x384xf32>,
    %12 = vector.extract_strided_slice %1 {offsets = [0, 20], sizes = [4, 384], strides = [1, 1]} : vector<4x432xf32> to vector<4x384xf32>
    %c20 = arith.constant 20 : index
    %c0_8 = arith.constant 0 : index
    %13 = vector.load %arg4[%c20, %c0_8] : memref<36x384xf32, #tpu.memory_space<vmem>>, vector<4x384xf32>
    tpu.vector_store %arg4[%c20, %c0_8], %12 {strides = array<i32>} : memref<36x384xf32, #tpu.memory_space<vmem>>, vector<4x384xf32>,
    %14 = vector.extract_strided_slice %1 {offsets = [0, 36], sizes = [4, 384], strides = [1, 1]} : vector<4x432xf32> to vector<4x384xf32>
    %c24 = arith.constant 24 : index
    %c0_9 = arith.constant 0 : index
    %15 = vector.load %arg4[%c24, %c0_9] : memref<36x384xf32, #tpu.memory_space<vmem>>, vector<4x384xf32>
    tpu.vector_store %arg4[%c24, %c0_9], %14 {strides = array<i32>} : memref<36x384xf32, #tpu.memory_space<vmem>>, vector<4x384xf32>,
    %16 = vector.extract_strided_slice %1 {offsets = [0, 37], sizes = [4, 384], strides = [1, 1]} : vector<4x432xf32> to vector<4x384xf32>
    %c28 = arith.constant 28 : index
    %c0_10 = arith.constant 0 : index
    %17 = vector.load %arg4[%c28, %c0_10] : memref<36x384xf32, #tpu.memory_space<vmem>>, vector<4x384xf32>
    tpu.vector_store %arg4[%c28, %c0_10], %16 {strides = array<i32>} : memref<36x384xf32, #tpu.memory_space<vmem>>, vector<4x384xf32>,
    %18 = vector.extract_strided_slice %1 {offsets = [0, 38], sizes = [4, 384], strides = [1, 1]} : vector<4x432xf32> to vector<4x384xf32>
    %c32 = arith.constant 32 : index
    %c0_11 = arith.constant 0 : index
    %19 = vector.load %arg4[%c32, %c0_11] : memref<36x384xf32, #tpu.memory_space<vmem>>, vector<4x384xf32>
    tpu.vector_store %arg4[%c32, %c0_11], %18 {strides = array<i32>} : memref<36x384xf32, #tpu.memory_space<vmem>>, vector<4x384xf32>,
    %c0_12 = arith.constant 0 : index
    %c0_13 = arith.constant 0 : index
    %20 = vector.load %arg2[%c0_12, %c0_13] : memref<8x36xf32, #tpu.memory_space<vmem>>, vector<8x36xf32>
    %c0_14 = arith.constant 0 : index
    %c0_15 = arith.constant 0 : index
    %21 = vector.load %arg4[%c0_14, %c0_15] : memref<36x384xf32, #tpu.memory_space<vmem>>, vector<36x384xf32>
    %cst = arith.constant dense<0.000000e+00> : vector<8x384xf32>
    %22 = tpu.matmul %20, %21, %cst {dimension_numbers = #tpu.dot_dimension_numbers<[1], [0], [0], [1], [0, 0, 1, 1], [], []>} : vector<8x36xf32>, vector<36x384xf32>, vector<8x384xf32> -> vector<8x384xf32>
    %c0_16 = arith.constant 0 : index
    %c0_17 = arith.constant 0 : index
    %c0_18 = arith.constant 0 : index
    %23 = vector.load %arg3[%c0_16, %c0_17, %c0_18] : memref<1x8x384xf32, #tpu.memory_space<vmem>>, vector<1x8x384xf32>
    %24 = vector.shape_cast %23 : vector<1x8x384xf32> to vector<8x384xf32>
    %25 = vector.shape_cast %22 : vector<8x384xf32> to vector<1x8x384xf32>
    tpu.vector_store %arg3[%c0_16, %c0_17, %c0_18], %25 {strides = array<i32>} : memref<1x8x384xf32, #tpu.memory_space<vmem>>, vector<1x8x384xf32>,
    return
  }
  func.func @transform_0(%arg0: i32) -> (i32, i32, i32) {
    %c0_i32 = arith.constant 0 : i32
    %c0_i32_0 = arith.constant 0 : i32
    %c0_i32_1 = arith.constant 0 : i32
    return %arg0, %c0_i32, %c0_i32_0 : i32, i32, i32
  }
  func.func @transform_1(%arg0: i32) -> (i32, i32) {
    %c0_i32 = arith.constant 0 : i32
    %c0_i32_0 = arith.constant 0 : i32
    %c0_i32_1 = arith.constant 0 : i32
    return %c0_i32, %c0_i32_0 : i32, i32
  }
  func.func @transform_2(%arg0: i32) -> (i32, i32, i32) {
    %c0_i32 = arith.constant 0 : i32
    %c0_i32_0 = arith.constant 0 : i32
    %c0_i32_1 = arith.constant 0 : i32
    return %arg0, %c0_i32, %c0_i32_0 : i32, i32, i32
  }
}

</mosaic_0001>

<llo_original>
// kernel: tpu_custom_call.1
$region0: #{tpu_custom_call.1}
  #allocation0 [shape = 'u32[]', space=smem, size = 0x4, offset = 0x4, fixed_abs, tag = 'smem constant byte address 0x4 - core index']
  #allocation1 [shape = 'u32[144,128]{1,0:T(1,128)}', space=vmem, size = 0x12000, scoped, tag = 'internal scratch']
  #allocation2 [shape = 'f32[36,384]{1,0:T(8,128)}', space=vmem, size = 0xf000, scoped, tag = 'scratch operand']
  %s0 = inlined_call_operand.hbm [shape: f32[2,4,432], index: 0, kind: input, shape index: {}]
  %s1 = inlined_call_operand.hbm [shape: f32[8,36], index: 1, kind: input, shape index: {}]
  %s2 = inlined_call_operand.hbm [shape: f32[2,8,384], index: 2, kind: output, shape index: {}]
  %s3 = sld [smem:[#allocation0]]
  $region49: #{tpu_custom_call.1} parent=0
    _
  %s5 = ssub.s32 1, %s3
  %s6 = scalar_select 0, %s5, %s3
  $region1: #{tpu_custom_call.1} parent=0
    #allocation3 [shape = 'u8[16384]{0}', space=vmem, size = 0x4000, scoped, tag = 'input window, operand 0']
    #allocation4 [shape = 's32[2]{0}', space=sflag, size = 0x8, scoped, tag = 'scoped memory for tpu_custom_call.1']
    #allocation5 [shape = 's32[2]{0}', space=sflag, size = 0x8, scoped, tag = 'scoped memory for tpu_custom_call.1']
    #allocation6 [shape = 'u8[4096]{0}', space=vmem, size = 0x1000, scoped, tag = 'input window, operand 1, single buffered']
    #allocation7 [shape = 's32[1]{0}', space=sflag, size = 0x4, scoped, tag = 'scoped memory for tpu_custom_call.1']
    #allocation8 [shape = 'u8[24576]{0}', space=vmem, size = 0x6000, scoped, tag = 'output window, operand 0']
    %7 = vsyncpa [#allocation4], 0
    %s8 = scalar_lea.sflag [#allocation4], 1
    %9 = vsyncpa %s8, 0
    %10 = vsyncpa [#allocation7], 0
    %11 = vsyncpa [#allocation5], 0
    %s12 = scalar_lea.sflag [#allocation5], 1
    %13 = vsyncpa %s12, 0
    loop: start=0, step=1, limit=4
    $region2: #{tpu_custom_call.1} parent=1 // loop_pre_header
      _
    $region3: #{tpu_custom_call.1} parent=1 // loop_header
      %s15 = sphi 0, %s19
      %p16 = scmp.ge.s32.totalorder %s15, 4
      %s25 = sphi 0, %s27
      %s28 = sphi 0, %s25
      %s29 = sphi 0, %s28
      %s45 = sphi 0, %s29
      %s49 = sphi 0, %s49
      %s51 = sphi 0, %s49
      %s52 = sphi 0, %s51
      %s66 = sphi 0, %s52
      %s72 = sphi 0, %s74
      %s75 = sphi 0, %s72
      %s76 = sphi 0, %s75
      %s92 = sphi 0, %s76
    $region4: #{tpu_custom_call.1} parent=1 // loop_header_branch
      %18 = sbr.rel (%p16) target = $region8
    $region5: #{tpu_custom_call.1} parent=1 // loop_body
      %s20 = ssub.s32 %s15, 1
      %s21 = ssub.s32 %s15, 2
      %s22 = sadd.s32 %s15, 1
      %s23 = ssub.s32 %s15, %s22
      %p24 = scmp.eq.s32.totalorder %s23, 0
      %s26 = sadd.s32 %s25, 1
      %s27 = scalar_select %p24, %s25, %s26
      %p30 = pneg %p24
      %p31 = scmp.eq.s32.totalorder %s15, 1
      %p32 = por %p30, %p31
      %p33 = scmp.ne.s32.totalorder %s25, %s28
      %p34 = scmp.eq.s32.totalorder %s15, 0
      %p35 = por %p33, %p34
      %p36 = scmp.ne.s32.totalorder %s25, %s28
      %p37 = scmp.eq.s32.totalorder %s20, 1
      %p38 = por %p36, %p37
      %p39 = scmp.ne.s32.totalorder %s28, %s29
      %p40 = scmp.eq.s32.totalorder %s20, 0
      %p41 = por %p39, %p40
      %p42 = scmp.ne.s32.totalorder %s28, %s29
      %p43 = scmp.eq.s32.totalorder %s21, 1
      %p44 = por %p42, %p43
      %p46 = scmp.ne.s32.totalorder %s29, %s45
      %p47 = scmp.eq.s32.totalorder %s21, 0
      %p48 = por %p46, %p47
      %s50 = sadd.s32 %s49, 1
      %p53 = scmp.eq.s32.totalorder %s15, 1
      %p54 = scmp.ne.s32.totalorder %s49, %s51
      %p55 = scmp.eq.s32.totalorder %s15, 0
      %p56 = por %p54, %p55
      %p57 = scmp.ne.s32.totalorder %s49, %s51
      %p58 = scmp.eq.s32.totalorder %s20, 1
      %p59 = por %p57, %p58
      %p60 = scmp.ne.s32.totalorder %s51, %s52
      %p61 = scmp.eq.s32.totalorder %s20, 0
      %p62 = por %p60, %p61
      %p63 = scmp.ne.s32.totalorder %s51, %s52
      %p64 = scmp.eq.s32.totalorder %s21, 1
      %p65 = por %p63, %p64
      %p67 = scmp.ne.s32.totalorder %s52, %s66
      %p68 = scmp.eq.s32.totalorder %s21, 0
      %p69 = por %p67, %p68
      %s70 = ssub.s32 %s15, %s22
      %p71 = scmp.eq.s32.totalorder %s70, 0
      %s73 = sadd.s32 %s72, 1
      %s74 = scalar_select %p71, %s72, %s73
      %p77 = pneg %p71
      %p78 = scmp.eq.s32.totalorder %s15, 1
      %p79 = por %p77, %p78
      %p80 = scmp.ne.s32.totalorder %s72, %s75
      %p81 = scmp.eq.s32.totalorder %s15, 0
      %p82 = por %p80, %p81
      %p83 = scmp.ne.s32.totalorder %s72, %s75
      %p84 = scmp.eq.s32.totalorder %s20, 1
      %p85 = por %p83, %p84
      %p86 = scmp.ne.s32.totalorder %s75, %s76
      %p87 = scmp.eq.s32.totalorder %s20, 0
      %p88 = por %p86, %p87
      %p89 = scmp.ne.s32.totalorder %s75, %s76
      %p90 = scmp.eq.s32.totalorder %s21, 1
      %p91 = por %p89, %p90
      %p93 = scmp.ne.s32.totalorder %s76, %s92
      %p94 = scmp.eq.s32.totalorder %s21, 0
      %p95 = por %p93, %p94
      %p96 = scmp.le.s32.totalorder 1, %s15
      %p97 = scmp.lt.s32.totalorder %s15, 3
      %p98 = pnand %p96, %p97
      %p99 = pneg %p98
      // Predicated region
      $region9: #{tpu_custom_call.1} parent=5 // pred_check
        _
      $region10: #{tpu_custom_call.1} parent=5 // pred_check_branch
        %101 = sbr.rel (%p98) target = $region12
      $region11: #{tpu_custom_call.1} parent=5 // pred_region
        %s102 = ssub.s32 %s15, 1
        // Predicated region
        $region13: #{tpu_custom_call.1} parent=11 // pred_check
          %p103 = pneg %p62
        $region14: #{tpu_custom_call.1} parent=11 // pred_check_branch
          %105 = sbr.rel (%p103) target = $region16
        $region15: #{tpu_custom_call.1} parent=11 // pred_region
          %s107 = ssub.s32 128, 128
          %108 = vsyncadd [#allocation7], %s107
          %s110 = sshll.u32 [#allocation6], 4
          %s111 = int_to_ptr.vmem [resolvable:$true] %s110
          %113 = dma.hbm_to_vmem [thread:$0]  %s1, 128, %s111, [#allocation7]
        $region16: #{tpu_custom_call.1} parent=11 // pred_fallthru
          _
      $region12: #{tpu_custom_call.1} parent=5 // pred_fallthru
        _
      %p114 = scmp.lt.s32.totalorder %s15, 2
      // Predicated region
      $region17: #{tpu_custom_call.1} parent=5 // pred_check
        %p115 = pneg %p114
      $region18: #{tpu_custom_call.1} parent=5 // pred_check_branch
        %117 = sbr.rel (%p115) target = $region20
      $region19: #{tpu_custom_call.1} parent=5 // pred_region
        // Predicated region
        $region21: #{tpu_custom_call.1} parent=19 // pred_check
          %p118 = pneg %p35
        $region22: #{tpu_custom_call.1} parent=19 // pred_check_branch
          %120 = sbr.rel (%p118) target = $region24
        $region23: #{tpu_custom_call.1} parent=19 // pred_region
          %s121 = sand.u32 %s25, 1
          %s122 = scalar_lea.sflag [#allocation4], %s121
          %s123 = sand.u32 %s25, 1
          %s124 = smul.addr %s123, 16
          %s125 = scalar_lea.vmem [#allocation3], %s124
          %s127 = ssub.s32 256, 256
          %128 = vsyncadd %s122, %s127
          %s129 = smul.addr %s15, 4
          %s130 = smul.addr %s129, 64
          %s131 = scalar_lea.hbm %s0, %s130
          %s133 = sshll.u32 %s125, 4
          %s134 = int_to_ptr.vmem [resolvable:$true] %s133
          %136 = dma.hbm_to_vmem [thread:$0]  %s131, 256, %s134, %s122
        $region24: #{tpu_custom_call.1} parent=19 // pred_fallthru
          _
      $region20: #{tpu_custom_call.1} parent=5 // pred_fallthru
        _
      %p137 = scmp.le.s32.totalorder 1, %s15
      %p138 = scmp.lt.s32.totalorder %s15, 3
      %p139 = pnand %p137, %p138
      %p140 = pneg %p139
      // Predicated region
      $region25: #{tpu_custom_call.1} parent=5 // pred_check
        _
      $region26: #{tpu_custom_call.1} parent=5 // pred_check_branch
        %142 = sbr.rel (%p139) target = $region28
      $region27: #{tpu_custom_call.1} parent=5 // pred_region
        %s143 = ssub.s32 %s15, 1
        %s144 = sand.u32 %s28, 1
        %s145 = scalar_lea.sflag [#allocation4], %s144
        %s146 = sand.u32 %s28, 1
        %s147 = smul.addr %s146, 16
        %s148 = scalar_lea.vmem [#allocation3], %s147
        // Predicated region
        $region29: #{tpu_custom_call.1} parent=27 // pred_check
          %p149 = pneg %p41
        $region30: #{tpu_custom_call.1} parent=27 // pred_check_branch
          %151 = sbr.rel (%p149) target = $region32
        $region31: #{tpu_custom_call.1} parent=27 // pred_region
          %152 = dma.done %s145, 256
        $region32: #{tpu_custom_call.1} parent=27 // pred_fallthru
          _
        // Predicated region
        $region33: #{tpu_custom_call.1} parent=27 // pred_check
          %p153 = pneg %p62
        $region34: #{tpu_custom_call.1} parent=27 // pred_check_branch
          %155 = sbr.rel (%p153) target = $region36
        $region35: #{tpu_custom_call.1} parent=27 // pred_region
          %156 = dma.done [#allocation7], 128
        $region36: #{tpu_custom_call.1} parent=27 // pred_fallthru
          _
        %s157 = sand.u32 %s28, 1
        %s158 = scalar_lea.sflag [#allocation4], %s157
        %s159 = sand.u32 %s28, 1
        %s160 = smul.addr %s159, 16
        %s161 = scalar_lea.vmem [#allocation3], %s160
        %p162 = pneg %p41
        %p163 = pneg %p38
        %p164 = pneg %p62
        %p165 = pneg %p59
        %p166 = pneg %p88
        %p167 = pneg %p85
        %s168 = sand.u32 %s75, 1
        %s169 = scalar_lea.sflag [#allocation5], %s168
        %s170 = sand.u32 %s75, 1
        %s171 = smul.addr %s170, 24
        %s172 = scalar_lea.vmem [#allocation8], %s171
        %v173 = vld [vmem:[%s148] sm:$0xff]
        %v174 = vld [vmem:[%s148 + $0x8] sm:$0xff]
        %v177 = vcombine.high %v173, %v173
        %179 = vst [vmem:[#allocation2] sm:$0xf] %v173
        %180 = vst [vmem:[#allocation2 + $0x8] sm:$0xf] %v177
        %181 = vst [vmem:[#allocation2 + $0x10] sm:$0xf] %v174
        %v182 = vcombine.low %v173, %v173
        %v183 = vcombine.low %v174, %v174
        %184 = vrot.lane.b32.xlu0 %v182, 127
        %v185 = vpop.permute.xlu0 %184
        %186 = vrot.lane.b32.xlu0 %v173, 127
        %v187 = vpop.permute.xlu0 %186
        %188 = vrot.lane.b32.xlu0 %v183, 127
        %v189 = vpop.permute.xlu0 %188
        %190 = vrot.lane.b32.xlu0 %v174, 127
        %v191 = vpop.permute.xlu0 %190
        %vm192 = vcmask 1039360
        %v193 = vsel %vm192, %v185, %v187
        %v194 = vsel %vm192, %v187, %v189
        %v195 = vsel %vm192, %v189, %v191
        %199 = vst [vmem:[#allocation2] sm:$0xf0] %v193
        %200 = vst [vmem:[#allocation2 + $0x8] sm:$0xf0] %v194
        %201 = vst [vmem:[#allocation2 + $0x10] sm:$0xf0] %v195
        %v202 = vcombine.high %v174, %v174
        %203 = vrot.lane.b32.xlu0 %v173, 126
        %v204 = vpop.permute.xlu0 %203
        %205 = vrot.lane.b32.xlu0 %v177, 126
        %v206 = vpop.permute.xlu0 %205
        %207 = vrot.lane.b32.xlu0 %v174, 126
        %v208 = vpop.permute.xlu0 %207
        %209 = vrot.lane.b32.xlu0 %v202, 126
        %v210 = vpop.permute.xlu0 %209
        %vm211 = vcmask 1031168
        %v212 = vsel %vm211, %v204, %v206
        %v213 = vsel %vm211, %v206, %v208
        %v214 = vsel %vm211, %v208, %v210
        %218 = vst [vmem:[#allocation2 + $0x18] sm:$0xf] %v212
        %219 = vst [vmem:[#allocation2 + $0x20] sm:$0xf] %v213
        %220 = vst [vmem:[#allocation2 + $0x28] sm:$0xf] %v214
        %221 = vrot.lane.b32.xlu0 %v182, 110
        %v222 = vpop.permute.xlu0 %221
        %223 = vrot.lane.b32.xlu0 %v173, 110
        %v224 = vpop.permute.xlu0 %223
        %225 = vrot.lane.b32.xlu0 %v183, 110
        %v226 = vpop.permute.xlu0 %225
        %227 = vrot.lane.b32.xlu0 %v174, 110
        %v228 = vpop.permute.xlu0 %227
        %vm229 = vcmask 900096
        %v230 = vsel %vm229, %v222, %v224
        %v231 = vsel %vm229, %v224, %v226
        %v232 = vsel %vm229, %v226, %v228
        %236 = vst [vmem:[#allocation2 + $0x18] sm:$0xf0] %v230
        %237 = vst [vmem:[#allocation2 + $0x20] sm:$0xf0] %v231
        %238 = vst [vmem:[#allocation2 + $0x28] sm:$0xf0] %v232
        %239 = vrot.lane.b32.xlu0 %v173, 109
        %v240 = vpop.permute.xlu0 %239
        %241 = vrot.lane.b32.xlu0 %v177, 109
        %v242 = vpop.permute.xlu0 %241
        %243 = vrot.lane.b32.xlu0 %v174, 109
        %v244 = vpop.permute.xlu0 %243
        %245 = vrot.lane.b32.xlu0 %v202, 109
        %v246 = vpop.permute.xlu0 %245
        %vm247 = vcmask 891904
        %v248 = vsel %vm247, %v240, %v242
        %v249 = vsel %vm247, %v242, %v244
        %v250 = vsel %vm247, %v244, %v246
        %254 = vst [vmem:[#allocation2 + $0x30] sm:$0xf] %v248
        %255 = vst [vmem:[#allocation2 + $0x38] sm:$0xf] %v249
        %256 = vst [vmem:[#allocation2 + $0x40] sm:$0xf] %v250
        %257 = vrot.lane.b32.xlu0 %v182, 108
        %v258 = vpop.permute.xlu0 %257
        %259 = vrot.lane.b32.xlu0 %v173, 108
        %v260 = vpop.permute.xlu0 %259
        %261 = vrot.lane.b32.xlu0 %v183, 108
        %v262 = vpop.permute.xlu0 %261
        %263 = vrot.lane.b32.xlu0 %v174, 108
        %v264 = vpop.permute.xlu0 %263
        %vm265 = vcmask 883712
        %v266 = vsel %vm265, %v258, %v260
        %v267 = vsel %vm265, %v260, %v262
        %v268 = vsel %vm265, %v262, %v264
        %272 = vst [vmem:[#allocation2 + $0x30] sm:$0xf0] %v266
        %273 = vst [vmem:[#allocation2 + $0x38] sm:$0xf0] %v267
        %274 = vst [vmem:[#allocation2 + $0x40] sm:$0xf0] %v268
        %275 = vrot.lane.b32.xlu0 %v173, 92
        %v276 = vpop.permute.xlu0 %275
        %277 = vrot.lane.b32.xlu0 %v177, 92
        %v278 = vpop.permute.xlu0 %277
        %279 = vrot.lane.b32.xlu0 %v174, 92
        %v280 = vpop.permute.xlu0 %279
        %281 = vrot.lane.b32.xlu0 %v202, 92
        %v282 = vpop.permute.xlu0 %281
        %vm283 = vcmask 752640
        %v284 = vsel %vm283, %v276, %v278
        %v285 = vsel %vm283, %v278, %v280
        %v286 = vsel %vm283, %v280, %v282
        %290 = vst [vmem:[#allocation2 + $0x48] sm:$0xf] %v284
        %291 = vst [vmem:[#allocation2 + $0x50] sm:$0xf] %v285
        %292 = vst [vmem:[#allocation2 + $0x58] sm:$0xf] %v286
        %293 = vrot.lane.b32.xlu0 %v182, 91
        %v294 = vpop.permute.xlu0 %293
        %295 = vrot.lane.b32.xlu0 %v173, 91
        %v296 = vpop.permute.xlu0 %295
        %297 = vrot.lane.b32.xlu0 %v183, 91
        %v298 = vpop.permute.xlu0 %297
        %299 = vrot.lane.b32.xlu0 %v174, 91
        %v300 = vpop.permute.xlu0 %299
        %vm301 = vcmask 744448
        %v302 = vsel %vm301, %v294, %v296
        %v303 = vsel %vm301, %v296, %v298
        %v304 = vsel %vm301, %v298, %v300
        %308 = vst [vmem:[#allocation2 + $0x48] sm:$0xf0] %v302
        %309 = vst [vmem:[#allocation2 + $0x50] sm:$0xf0] %v303
        %310 = vst [vmem:[#allocation2 + $0x58] sm:$0xf0] %v304
        %311 = vrot.lane.b32.xlu0 %v173, 90
        %v312 = vpop.permute.xlu0 %311
        %313 = vrot.lane.b32.xlu0 %v177, 90
        %v314 = vpop.permute.xlu0 %313
        %315 = vrot.lane.b32.xlu0 %v174, 90
        %v316 = vpop.permute.xlu0 %315
        %317 = vrot.lane.b32.xlu0 %v202, 90
        %v318 = vpop.permute.xlu0 %317
        %vm319 = vcmask 736256
        %v320 = vsel %vm319, %v312, %v314
        %v321 = vsel %vm319, %v314, %v316
        %v322 = vsel %vm319, %v316, %v318
        %326 = vst [vmem:[#allocation2 + $0x60] sm:$0xf] %v320
        %327 = vst [vmem:[#allocation2 + $0x68] sm:$0xf] %v321
        %328 = vst [vmem:[#allocation2 + $0x70] sm:$0xf] %v322
        %v329 = vld [vmem:[#allocation6] sm:$0xff]
        %v330 = vld [vmem:[#allocation2] sm:$0xff]
        %v331 = vld [vmem:[#allocation2 + $0x8] sm:$0xff]
        %v332 = vld [vmem:[#allocation2 + $0x10] sm:$0xff]
        %v333 = vld [vmem:[#allocation2 + $0x18] sm:$0xff]
        %v334 = vld [vmem:[#allocation2 + $0x20] sm:$0xff]
        %v335 = vld [vmem:[#allocation2 + $0x28] sm:$0xff]
        %v336 = vld [vmem:[#allocation2 + $0x30] sm:$0xff]
        %v337 = vld [vmem:[#allocation2 + $0x38] sm:$0xff]
        %v338 = vld [vmem:[#allocation2 + $0x40] sm:$0xff]
        %v339 = vld [vmem:[#allocation2 + $0x48] sm:$0xff]
        %v340 = vld [vmem:[#allocation2 + $0x50] sm:$0xff]
        %v341 = vld [vmem:[#allocation2 + $0x58] sm:$0xff]
        %v342 = vld [vmem:[#allocation2 + $0x60] sm:$0xf]
        %v343 = vld [vmem:[#allocation2 + $0x68] sm:$0xf]
        %v344 = vld [vmem:[#allocation2 + $0x70] sm:$0xf]
        %vm345 = vcmask 293888
        %v347 = vsel %vm345, %v329, 0
        %vm349 = vcmask 1043456
        %v351 = vsel %vm349, %v342, 0
        %v354 = vsel %vm349, %v343, 0
        %v357 = vsel %vm349, %v344, 0
        %359 = vmatprep.subr.mxu0 0.0
        %360 = vmatpush1.msra.mxu0 0.0
        %361 = vmatprep.subr.mxu0 0.0
        %362 = vmatpush1.msra.mxu0 0.0
        %363 = vmatprep.subr.mxu0 0.0
        %364 = vmatpush1.msra.mxu0 0.0
        %365 = vmatprep.subr.mxu0 0.0
        %366 = vmatpush1.msra.mxu0 0.0
        %367 = vmatprep.subr.mxu0 0.0
        %368 = vmatpush1.msra.mxu0 0.0
        %369 = vmatprep.subr.mxu0 0.0
        %370 = vmatpush1.msra.mxu0 0.0
        %371 = vmatprep.subr.mxu0 0.0
        %372 = vmatpush1.msra.mxu0 0.0
        %373 = vmatprep.subr.mxu0 0.0
        %374 = vmatpush1.msra.mxu0 0.0
        %375 = vmatprep.subr.mxu0 0.0
        %376 = vmatpush1.msra.mxu0 0.0
        %377 = vmatprep.subr.mxu0 0.0
        %378 = vmatpush1.msra.mxu0 0.0
        %379 = vmatprep.subr.mxu0 0.0
        %380 = vmatpush1.msra.mxu0 0.0
        %381 = vmatprep.subr.mxu0 %v354
        %382 = vmatpush1.msra.mxu0 %v351
        %383 = vmatprep.subr.mxu0 %v340
        %384 = vmatpush1.msra.mxu0 %v339
        %385 = vmatprep.subr.mxu0 %v337
        %386 = vmatpush1.msra.mxu0 %v336
        %387 = vmatprep.subr.mxu0 %v334
        %388 = vmatpush1.msra.mxu0 %v333
        %389 = vmatprep.subr.mxu0 %v331
        %390 = vmatpush1.msra.mxu0 %v330
        %391 = vmatprep.subr.mxu0 0.0
        %392 = vmatpush2.msra.mxu0 0.0
        %393 = vmatprep.subr.mxu0 0.0
        %394 = vmatpush2.msra.mxu0 0.0
        %395 = vmatprep.subr.mxu0 0.0
        %396 = vmatpush2.msra.mxu0 0.0
        %397 = vmatprep.subr.mxu0 0.0
        %398 = vmatpush2.msra.mxu0 0.0
        %399 = vmatprep.subr.mxu0 0.0
        %400 = vmatpush2.msra.mxu0 0.0
        %401 = vmatprep.subr.mxu0 0.0
        %402 = vmatpush2.msra.mxu0 0.0
        %403 = vmatprep.subr.mxu0 0.0
        %404 = vmatpush2.msra.mxu0 0.0
        %405 = vmatprep.subr.mxu0 0.0
        %406 = vmatpush2.msra.mxu0 0.0
        %407 = vmatprep.subr.mxu0 0.0
        %408 = vmatpush2.msra.mxu0 0.0
        %409 = vmatprep.subr.mxu0 0.0
        %410 = vmatpush2.msra.mxu0 0.0
        %411 = vmatprep.subr.mxu0 0.0
        %412 = vmatpush2.msra.mxu0 0.0
        %413 = vmatprep.subr.mxu0 0.0
        %414 = vmatpush2.msra.mxu0 0.0
        %415 = vmatprep.subr.mxu0 0.0
        %416 = vmatpush2.msra.mxu0 0.0
        %417 = vmatprep.subr.mxu0 0.0
        %418 = vmatpush2.msra.mxu0 0.0
        %419 = vmatprep.subr.mxu0 0.0
        %420 = vmatpush2.msra.mxu0 0.0
        %421 = vmatprep.subr.mxu0 0.0
        %422 = vmatpush2.msra.mxu0 0.0
        %423 = vmatprep.mubr.f32.mxu0 0.0
        %424 = vmatmul.mubr.f32.gmra.mxu0 %v347
        %v425 = vpop.f32.mrf.mxu0
        %v426 = vadd.f32 0.0, %v425
        %v427 = vpop.f32.mrf.mxu0
        %v428 = vadd.f32 0.0, %v427
        %429 = vdwg.mxu0
        %430 = vmatprep.subr.mxu0 0.0
        %431 = vmatpush1.msra.mxu0 0.0
        %432 = vmatprep.subr.mxu0 0.0
        %433 = vmatpush1.msra.mxu0 0.0
        %434 = vmatprep.subr.mxu0 0.0
        %435 = vmatpush1.msra.mxu0 0.0
        %436 = vmatprep.subr.mxu0 0.0
        %437 = vmatpush1.msra.mxu0 0.0
        %438 = vmatprep.subr.mxu0 0.0
        %439 = vmatpush1.msra.mxu0 0.0
        %440 = vmatprep.subr.mxu0 0.0
        %441 = vmatpush1.msra.mxu0 0.0
        %442 = vmatprep.subr.mxu0 0.0
        %443 = vmatpush1.msra.mxu0 0.0
        %444 = vmatprep.subr.mxu0 0.0
        %445 = vmatpush1.msra.mxu0 0.0
        %446 = vmatprep.subr.mxu0 0.0
        %447 = vmatpush1.msra.mxu0 0.0
        %448 = vmatprep.subr.mxu0 0.0
        %449 = vmatpush1.msra.mxu0 0.0
        %450 = vmatprep.subr.mxu0 0.0
        %451 = vmatpush1.msra.mxu0 0.0
        %452 = vmatprep.subr.mxu0 0.0
        %453 = vmatpush1.msra.mxu0 %v357
        %454 = vmatprep.subr.mxu0 0.0
        %455 = vmatpush1.msra.mxu0 %v341
        %456 = vmatprep.subr.mxu0 0.0
        %457 = vmatpush1.msra.mxu0 %v338
        %458 = vmatprep.subr.mxu0 0.0
        %459 = vmatpush1.msra.mxu0 %v335
        %460 = vmatprep.subr.mxu0 0.0
        %461 = vmatpush1.msra.mxu0 %v332
        %462 = vmatprep.subr.mxu0 0.0
        %463 = vmatpush2.msra.mxu0 0.0
        %464 = vmatprep.subr.mxu0 0.0
        %465 = vmatpush2.msra.mxu0 0.0
        %466 = vmatprep.subr.mxu0 0.0
        %467 = vmatpush2.msra.mxu0 0.0
        %468 = vmatprep.subr.mxu0 0.0
        %469 = vmatpush2.msra.mxu0 0.0
        %470 = vmatprep.subr.mxu0 0.0
        %471 = vmatpush2.msra.mxu0 0.0
        %472 = vmatprep.subr.mxu0 0.0
        %473 = vmatpush2.msra.mxu0 0.0
        %474 = vmatprep.subr.mxu0 0.0
        %475 = vmatpush2.msra.mxu0 0.0
        %476 = vmatprep.subr.mxu0 0.0
        %477 = vmatpush2.msra.mxu0 0.0
        %478 = vmatprep.subr.mxu0 0.0
        %479 = vmatpush2.msra.mxu0 0.0
        %480 = vmatprep.subr.mxu0 0.0
        %481 = vmatpush2.msra.mxu0 0.0
        %482 = vmatprep.subr.mxu0 0.0
        %483 = vmatpush2.msra.mxu0 0.0
        %484 = vmatprep.subr.mxu0 0.0
        %485 = vmatpush2.msra.mxu0 0.0
        %486 = vmatprep.subr.mxu0 0.0
        %487 = vmatpush2.msra.mxu0 0.0
        %488 = vmatprep.subr.mxu0 0.0
        %489 = vmatpush2.msra.mxu0 0.0
        %490 = vmatprep.subr.mxu0 0.0
        %491 = vmatpush2.msra.mxu0 0.0
        %492 = vmatprep.subr.mxu0 0.0
        %493 = vmatpush2.msra.mxu0 0.0
        %494 = vmatprep.mubr.f32.mxu0 0.0
        %495 = vmatmul.mubr.f32.gmra.mxu0 %v347
        %v496 = vpop.f32.mrf.mxu0
        %v497 = vadd.f32 0.0, %v496
        %v498 = vpop.f32.mrf.mxu0
        %499 = vdwg.mxu0
        %500 = vst [vmem:[%s172] sm:$0xff] %v426
        %501 = vst [vmem:[%s172 + $0x8] sm:$0xff] %v428
        %502 = vst [vmem:[%s172 + $0x10] sm:$0xff] %v497
        %s503 = sand.u32 %s75, 1
        %s504 = scalar_lea.sflag [#allocation5], %s503
        %s505 = sand.u32 %s75, 1
        %s506 = smul.addr %s505, 24
        %s507 = scalar_lea.vmem [#allocation8], %s506
        // Predicated region
        $region37: #{tpu_custom_call.1} parent=27 // pred_check
          %p508 = pneg %p85
        $region38: #{tpu_custom_call.1} parent=27 // pred_check_branch
          %510 = sbr.rel (%p508) target = $region40
        $region39: #{tpu_custom_call.1} parent=27 // pred_region
          %s512 = ssub.s32 384, 384
          %513 = vsyncadd %s504, %s512
          %s514 = smul.addr %s20, 3
          %s515 = smul.addr %s514, 128
          %s516 = scalar_lea.hbm %s2, %s515
          %s518 = sshll.u32 %s507, 4
          %s519 = int_to_ptr.vmem [resolvable:$true] %s518
          %521 = dma.vmem_to_hbm [thread:$0]  %s519, 384, %s516, %s504
        $region40: #{tpu_custom_call.1} parent=27 // pred_fallthru
          _
      $region28: #{tpu_custom_call.1} parent=5 // pred_fallthru
        _
      %p522 = scmp.le.s32.totalorder 2, %s15
      // Predicated region
      $region41: #{tpu_custom_call.1} parent=5 // pred_check
        %p523 = pneg %p522
      $region42: #{tpu_custom_call.1} parent=5 // pred_check_branch
        %525 = sbr.rel (%p523) target = $region44
      $region43: #{tpu_custom_call.1} parent=5 // pred_region
        %s526 = ssub.s32 %s15, 2
        // Predicated region
        $region45: #{tpu_custom_call.1} parent=43 // pred_check
          %p527 = pneg %p91
        $region46: #{tpu_custom_call.1} parent=43 // pred_check_branch
          %529 = sbr.rel (%p527) target = $region48
        $region47: #{tpu_custom_call.1} parent=43 // pred_region
          %s530 = sand.u32 %s76, 1
          %s531 = scalar_lea.sflag [#allocation5], %s530
          %s532 = sand.u32 %s76, 1
          %s533 = smul.addr %s532, 24
          %s534 = scalar_lea.vmem [#allocation8], %s533
          %535 = dma.done %s531, 384
        $region48: #{tpu_custom_call.1} parent=43 // pred_fallthru
          _
      $region44: #{tpu_custom_call.1} parent=5 // pred_fallthru
        _
    $region6: #{tpu_custom_call.1} parent=1 // loop_footer
      %s19 = sadd.s32 1, %s15
    $region7: #{tpu_custom_call.1} parent=1 // loop_footer_branch
      %14 = sbr.rel target = $region3
    $region8: #{tpu_custom_call.1} parent=1 // loop_exit
      _
    %536 = vsyncpa [#allocation4], 1
    %s537 = scalar_lea.sflag [#allocation4], 1
    %538 = vsyncpa %s537, 1
    %539 = vsyncpa [#allocation7], 1
    %540 = vsyncpa [#allocation5], 1
    %s541 = scalar_lea.sflag [#allocation5], 1
    %542 = vsyncpa %s541, 1

</llo_original>
